<compile_context>
chip_gen: v7x
topology: tpu7x:2x2x1
jax: 0.10.0
libtpu: 0.0.40
codegen_flags: <defaults>
</compile_context>

<pallas_src>
import jax
import jax.numpy as jnp
from jax.experimental import pallas as pl
from jax.experimental.pallas import tpu as pltpu


def _round_up(x, m):
    return ((x + m - 1) // m) * m


# ---------------------------------------------------------------------------
# Pallas kernel: fused pw1(+BN) -> ReLU -> pw2(+BN) for one (C, tile_T) slab.
# ---------------------------------------------------------------------------
def ffn_kernel(x_ref, w1_ref, b1_ref, w2_ref, b2_ref, o_ref):
    # In-kernel cast to bf16 (no separate XLA astype pass over HBM).
    x = x_ref[...].astype(jnp.bfloat16)                       # (ed, Tt)
    # h = W1 @ x  -> (hidden, Tt), f32 accumulation on the MXU
    h = jnp.dot(w1_ref[...], x, preferred_element_type=jnp.float32)
    h = jnp.maximum(h + b1_ref[...], 0.0)                     # bias + ReLU in f32
    # y = W2 @ h  -> (ed, Tt); bf16 operands into the MXU, accumulate f32
    y = jnp.dot(w2_ref[...], h.astype(w2_ref.dtype),
                preferred_element_type=jnp.float32)
    o_ref[...] = (y + b2_ref[...]).astype(o_ref.dtype)        # lane-dense store


def _pick_tile_t(N, T, max_tile_t=2048):
    """Largest 128-multiple token tile (capped), keeping grid product >= 2
    when possible so both v7x TensorCores get work even at batch 1."""
    if T <= 128:
        return T                       # full-extent block (exempt from 128 rule)
    tt = min(_round_up(T, 128), max_tile_t)
    if N == 1:
        tt = min(tt, _round_up(pl.cdiv(T, 2), 128))
    return tt


def _vmem_limit_bytes(ed, hidden, tile_t, x_itemsize, out_itemsize):
    dbl = 2  # double-buffering
    x_b = dbl * ed * tile_t * x_itemsize
    o_b = dbl * ed * tile_t * out_itemsize
    w_b = dbl * (2 * hidden * ed) * 2 + dbl * (hidden + ed) * 4
    h_b = 3 * hidden * tile_t * 4      # h (f32), relu result, bf16 copy headroom
    footprint = x_b + o_b + w_b + h_b
    # footprint-derived with headroom; floor at 16 MiB, cap well under v7x's
    # 64 MiB physical VMEM so the second TensorCore keeps its working set.
    return int(min(max(2 * footprint + (4 << 20), 16 << 20), 32 << 20))


def ffn_pallas(x_tok, w1, b1, w2, b2, *, tile_t, out_dtype=jnp.bfloat16):
    """x_tok: (N, ed, T) any float dtype (channels-major tokens).
    w1: (hidden, ed) bf16, b1: (hidden, 1) f32, w2: (ed, hidden) bf16, b2: (ed, 1) f32."""
    N, ed, T = x_tok.shape
    hidden = w1.shape[0]
    assert tile_t == T or tile_t % 128 == 0

    grid = (N, pl.cdiv(T, tile_t))     # ragged last tile handled by Pallas
    flops = 4 * N * T * ed * hidden
    bytes_accessed = (x_tok.size * x_tok.dtype.itemsize
                      + w1.size * w1.dtype.itemsize + w2.size * w2.dtype.itemsize
                      + b1.size * 4 + b2.size * 4
                      + N * ed * T * jnp.dtype(out_dtype).itemsize)

    return pl.pallas_call(
        ffn_kernel,
        out_shape=jax.ShapeDtypeStruct((N, ed, T), out_dtype),
        grid_spec=pltpu.PrefetchScalarGridSpec(
            num_scalar_prefetch=0,
            grid=grid,
            in_specs=[
                # x tile: batch squeezed, (ed, tile_t) — tokens on lanes
                pl.BlockSpec((None, ed, tile_t), lambda n, t: (n, 0, t)),
                pl.BlockSpec((hidden, ed), lambda n, t: (0, 0)),   # W1 resident
                pl.BlockSpec((hidden, 1), lambda n, t: (0, 0)),    # b1 resident
                pl.BlockSpec((ed, hidden), lambda n, t: (0, 0)),   # W2 resident
                pl.BlockSpec((ed, 1), lambda n, t: (0, 0)),        # b2 resident
            ],
            out_specs=pl.BlockSpec((None, ed, tile_t), lambda n, t: (n, 0, t)),
        ),
        compiler_params=pltpu.CompilerParams(
            dimension_semantics=("parallel", "parallel"),
            vmem_limit_bytes=_vmem_limit_bytes(
                ed, hidden, tile_t,
                x_tok.dtype.itemsize, jnp.dtype(out_dtype).itemsize),
        ),
        cost_estimate=pl.CostEstimate(
            flops=flops, transcendentals=0, bytes_accessed=bytes_accessed),
    )(x_tok, w1, b1, w2, b2)


# ---------------------------------------------------------------------------
# Parameter construction (deterministic) + BN folding.
# ---------------------------------------------------------------------------
def fold_conv_bn(conv_w, gamma, beta, running_mean, running_var, eps=1e-5):
    """conv_w: (out, in) for a 1x1 conv.  Returns W (out, in), bias (out, 1) so
    that  y = W @ x + bias  (channels-major)."""
    scale = gamma / jnp.sqrt(running_var + eps)               # (out,)
    w_eff = conv_w * scale[:, None]                           # (out, in)
    b_eff = beta - running_mean * scale                       # (out,)
    return w_eff, b_eff[:, None]


def make_ffn_params(key, ed, h):
    k1, k2, k3, k4, k5, k6, k7 = jax.random.split(key, 7)
    conv1_w = jax.random.normal(k1, (h, ed), jnp.float32) * 0.1
    conv2_w = jax.random.normal(k2, (ed, h), jnp.float32) * 0.1

    # BN1: gamma=1, beta=0 (Conv2d_BN init); random running stats.
    bn1_gamma = jnp.ones((h,), jnp.float32)
    bn1_beta = jnp.zeros((h,), jnp.float32)
    bn1_mean = jax.random.normal(k3, (h,), jnp.float32) * 0.05
    bn1_var = jax.nn.softplus(jax.random.normal(k4, (h,), jnp.float32)) + 0.5

    # BN2: the module initializes gamma to 0 (bn_weight_init=0), which would
    # make the test vacuous (all-zero output).  Use a trained-state-like
    # nonzero gamma so the fused matmul/ReLU path is actually exercised;
    # the forward semantics (fold + matmul) are identical for any gamma.
    bn2_gamma = jax.nn.softplus(jax.random.normal(k7, (ed,), jnp.float32)) + 0.2
    bn2_beta = jnp.zeros((ed,), jnp.float32)
    bn2_mean = jax.random.normal(k5, (ed,), jnp.float32) * 0.05
    bn2_var = jax.nn.softplus(jax.random.normal(k6, (ed,), jnp.float32)) + 0.5

    w1, b1 = fold_conv_bn(conv1_w, bn1_gamma, bn1_beta, bn1_mean, bn1_var)
    w2, b2 = fold_conv_bn(conv2_w, bn2_gamma, bn2_beta, bn2_mean, bn2_var)
    return w1, b1, w2, b2


# ---------------------------------------------------------------------------
# NCHW wrapper: free reshape only — no astype / pad / slice passes over x.
# ---------------------------------------------------------------------------
def ffn_forward_nchw(x_nchw, w1, b1, w2, b2, *,
                     out_dtype=jnp.bfloat16, max_tile_t=2048):
    N, C, H, W = x_nchw.shape
    T = H * W
    x_tok = x_nchw.reshape(N, C, T)                           # channels-major, free
    tt = _pick_tile_t(N, T, max_tile_t)
    y_tok = ffn_pallas(x_tok,
                       w1.astype(jnp.bfloat16), b1,
                       w2.astype(jnp.bfloat16), b2,
                       tile_t=tt, out_dtype=out_dtype)
    return y_tok.reshape(N, C, H, W)


def ffn_reference(x_nchw, w1, b1, w2, b2, out_dtype=jnp.bfloat16):
    """Mirrors the kernel's bf16-operand / f32-accumulate math."""
    N, C, H, W = x_nchw.shape
    x = x_nchw.reshape(N, C, H * W).astype(jnp.bfloat16).astype(jnp.float32)
    w1f = w1.astype(jnp.bfloat16).astype(jnp.float32)
    w2f = w2.astype(jnp.bfloat16).astype(jnp.float32)
    h = jnp.maximum(jnp.einsum('he,net->nht', w1f, x) + b1[None], 0.0)
    h = h.astype(jnp.bfloat16).astype(jnp.float32)
    y = jnp.einsum('eh,nht->net', w2f, h) + b2[None]
    return y.astype(out_dtype).reshape(N, C, H, W)


if __name__ == "__main__":
    ed, hidden = 4, 32
    N, H, W = 2, 16, 16

    key = jax.random.PRNGKey(0)
    kx, kp = jax.random.split(key)
    x = jax.random.normal(kx, (N, ed, H, W), jnp.float32)          # NCHW input
    w1, b1, w2, b2 = make_ffn_params(kp, ed, hidden)

    y = ffn_forward_nchw(x, w1, b1, w2, b2)
    y = jax.block_until_ready(y)

    y_ref = ffn_reference(x, w1, b1, w2, b2)
    assert y.shape == x.shape
    assert jnp.allclose(y.astype(jnp.float32), y_ref.astype(jnp.float32),
                        atol=1e-2, rtol=1e-2), (
        float(jnp.max(jnp.abs(y.astype(jnp.float32) - y_ref.astype(jnp.float32)))))

    print("KERNEL_OK")
</pallas_src>

<mosaic_0001>
module attributes {stable_mosaic.version = 11 : i64} {
  func.func @ffn_kernel(%arg0: i32, %arg1: i32, %arg2: memref<1x4x256xf32, #tpu.memory_space<vmem>>, %arg3: memref<32x4xbf16, #tpu.memory_space<vmem>>, %arg4: memref<32x1xf32, #tpu.memory_space<vmem>>, %arg5: memref<4x32xbf16, #tpu.memory_space<vmem>>, %arg6: memref<4x1xf32, #tpu.memory_space<vmem>>, %arg7: memref<1x4x256xbf16, #tpu.memory_space<vmem>>) attributes {dimension_semantics = [#tpu.dimension_semantics<parallel>, #tpu.dimension_semantics<parallel>], iteration_bounds = array<i64: 2, 1>, scalar_prefetch = 0 : i64, scratch_operands = 0 : i64, tpu.core_type = #tpu.core_type<tc>, window_params = [{transform_indices = @transform_0, window_bounds = array<i64: 1, 4, 256>}, {pipeline_mode = #tpu.pipeline_mode<synchronous>, transform_indices = @transform_1, window_bounds = array<i64: 32, 4>}, {pipeline_mode = #tpu.pipeline_mode<synchronous>, transform_indices = @transform_2, window_bounds = array<i64: 32, 1>}, {pipeline_mode = #tpu.pipeline_mode<synchronous>, transform_indices = @transform_3, window_bounds = array<i64: 4, 32>}, {pipeline_mode = #tpu.pipeline_mode<synchronous>, transform_indices = @transform_4, window_bounds = array<i64: 4, 1>}, {transform_indices = @transform_5, window_bounds = array<i64: 1, 4, 256>}]} {
    %c0 = arith.constant 0 : index
    %c0_0 = arith.constant 0 : index
    %c0_1 = arith.constant 0 : index
    %0 = vector.load %arg2[%c0, %c0_0, %c0_1] : memref<1x4x256xf32, #tpu.memory_space<vmem>>, vector<1x4x256xf32>
    %1 = vector.shape_cast %0 : vector<1x4x256xf32> to vector<4x256xf32>
    %2 = arith.truncf %1 : vector<4x256xf32> to vector<4x256xbf16>
    %c0_2 = arith.constant 0 : index
    %c0_3 = arith.constant 0 : index
    %3 = vector.load %arg3[%c0_2, %c0_3] : memref<32x4xbf16, #tpu.memory_space<vmem>>, vector<32x4xbf16>
    %cst = arith.constant dense<0.000000e+00> : vector<32x256xf32>
    %4 = tpu.matmul %3, %2, %cst {dimension_numbers = #tpu.dot_dimension_numbers<[1], [0], [0], [1], [0, 0, 1, 1], [], []>} : vector<32x4xbf16>, vector<4x256xbf16>, vector<32x256xf32> -> vector<32x256xf32>
    %c0_4 = arith.constant 0 : index
    %c0_5 = arith.constant 0 : index
    %5 = vector.load %arg4[%c0_4, %c0_5] : memref<32x1xf32, #tpu.memory_space<vmem>>, vector<32x1xf32>
    %6 = vector.broadcast %5 : vector<32x1xf32> to vector<32x256xf32>
    %7 = arith.addf %4, %6 : vector<32x256xf32>
    %cst_6 = arith.constant 0.000000e+00 : f32
    %8 = vector.broadcast %cst_6 : f32 to vector<32x256xf32>
    %9 = arith.maximumf %7, %8 : vector<32x256xf32>
    %c0_7 = arith.constant 0 : index
    %c0_8 = arith.constant 0 : index
    %10 = vector.load %arg5[%c0_7, %c0_8] : memref<4x32xbf16, #tpu.memory_space<vmem>>, vector<4x32xbf16>
    %11 = arith.truncf %9 : vector<32x256xf32> to vector<32x256xbf16>
    %cst_9 = arith.constant dense<0.000000e+00> : vector<4x256xf32>
    %12 = tpu.matmul %10, %11, %cst_9 {dimension_numbers = #tpu.dot_dimension_numbers<[1], [0], [0], [1], [0, 0, 1, 1], [], []>} : vector<4x32xbf16>, vector<32x256xbf16>, vector<4x256xf32> -> vector<4x256xf32>
    %c0_10 = arith.constant 0 : index
    %c0_11 = arith.constant 0 : index
    %13 = vector.load %arg6[%c0_10, %c0_11] : memref<4x1xf32, #tpu.memory_space<vmem>>, vector<4x1xf32>
    %14 = vector.broadcast %13 : vector<4x1xf32> to vector<4x256xf32>
    %15 = arith.addf %12, %14 : vector<4x256xf32>
    %16 = arith.truncf %15 : vector<4x256xf32> to vector<4x256xbf16>
    %c0_12 = arith.constant 0 : index
    %c0_13 = arith.constant 0 : index
    %c0_14 = arith.constant 0 : index
    %17 = vector.load %arg7[%c0_12, %c0_13, %c0_14] : memref<1x4x256xbf16, #tpu.memory_space<vmem>>, vector<1x4x256xbf16>
    %18 = vector.shape_cast %17 : vector<1x4x256xbf16> to vector<4x256xbf16>
    %19 = vector.shape_cast %16 : vector<4x256xbf16> to vector<1x4x256xbf16>
    tpu.vector_store %arg7[%c0_12, %c0_13, %c0_14], %19 {strides = array<i32>} : memref<1x4x256xbf16, #tpu.memory_space<vmem>>, vector<1x4x256xbf16>,
    return
  }
  func.func @transform_0(%arg0: i32, %arg1: i32) -> (i32, i32, i32) {
    %c0_i32 = arith.constant 0 : i32
    %c0_i32_0 = arith.constant 0 : i32
    return %arg0, %c0_i32, %arg1 : i32, i32, i32
  }
  func.func @transform_1(%arg0: i32, %arg1: i32) -> (i32, i32) {
    %c0_i32 = arith.constant 0 : i32
    %c0_i32_0 = arith.constant 0 : i32
    %c0_i32_1 = arith.constant 0 : i32
    return %c0_i32, %c0_i32_0 : i32, i32
  }
  func.func @transform_2(%arg0: i32, %arg1: i32) -> (i32, i32) {
    %c0_i32 = arith.constant 0 : i32
    %c0_i32_0 = arith.constant 0 : i32
    %c0_i32_1 = arith.constant 0 : i32
    return %c0_i32, %c0_i32_0 : i32, i32
  }
  func.func @transform_3(%arg0: i32, %arg1: i32) -> (i32, i32) {
    %c0_i32 = arith.constant 0 : i32
    %c0_i32_0 = arith.constant 0 : i32
    %c0_i32_1 = arith.constant 0 : i32
    return %c0_i32, %c0_i32_0 : i32, i32
  }
  func.func @transform_4(%arg0: i32, %arg1: i32) -> (i32, i32) {
    %c0_i32 = arith.constant 0 : i32
    %c0_i32_0 = arith.constant 0 : i32
    %c0_i32_1 = arith.constant 0 : i32
    return %c0_i32, %c0_i32_0 : i32, i32
  }
  func.func @transform_5(%arg0: i32, %arg1: i32) -> (i32, i32, i32) {
    %c0_i32 = arith.constant 0 : i32
    %c0_i32_0 = arith.constant 0 : i32
    return %arg0, %c0_i32, %arg1 : i32, i32, i32
  }
}

</mosaic_0001>

<llo_original>
// kernel: tpu_custom_call.1
$region0: #{tpu_custom_call.1}
  #allocation0 [shape = 'u32[]', space=smem, size = 0x4, offset = 0x4, fixed_abs, tag = 'smem constant byte address 0x4 - core index']
  #allocation1 [shape = 'u32[144,128]{1,0:T(1,128)}', space=vmem, size = 0x12000, scoped, tag = 'internal scratch']
  %s0 = inlined_call_operand.vmem [shape: f32[2,4,256], index: 0, kind: input, shape index: {}]
  %s1 = inlined_call_operand.vmem [shape: bf16[32,4], index: 1, kind: input, shape index: {}]
  %s2 = inlined_call_operand.vmem [shape: f32[32,1], index: 2, kind: input, shape index: {}]
  %s3 = inlined_call_operand.vmem [shape: bf16[4,32], index: 3, kind: input, shape index: {}]
  %s4 = inlined_call_operand.vmem [shape: f32[4,1], index: 4, kind: input, shape index: {}]
  %s5 = inlined_call_operand.hbm [shape: bf16[2,4,256], index: 5, kind: output, shape index: {}]
  %s6 = sld [smem:[#allocation0]]
  $region53: #{tpu_custom_call.1} parent=0
    _
  %s8 = ssub.s32 1, %s6
  %s9 = scalar_select 0, %s8, %s6
  $region1: #{tpu_custom_call.1} parent=0
    #allocation2 [shape = 'u8[4096]{0}', space=vmem, size = 0x1000, scoped, tag = 'output window, operand 0']
    #allocation3 [shape = 's32[2]{0}', space=sflag, size = 0x8, scoped, tag = 'scoped memory for tpu_custom_call.1']
    %10 = vsyncpa [#allocation3], 0
    %s11 = scalar_lea.sflag [#allocation3], 1
    %12 = vsyncpa %s11, 0
    loop: start=0, step=1, limit=4
    $region2: #{tpu_custom_call.1} parent=1 // loop_pre_header
      _
    $region3: #{tpu_custom_call.1} parent=1 // loop_header
      %s14 = sphi 0, %s18
      %p15 = scmp.ge.s32.totalorder %s14, 4
      %s21 = sphi 0, %s33
      %s22 = sphi 0, %s29
      %s23 = sphi 0, %s21
      %s24 = sphi 0, %s22
      %s25 = sphi 0, %s23
      %s26 = sphi 0, %s24
      %s38 = sphi 0, %s40
      %s41 = sphi 0, %s38
      %s42 = sphi 0, %s41
      %s58 = sphi 0, %s42
      %s62 = sphi 0, %s62
      %s64 = sphi 0, %s62
      %s65 = sphi 0, %s64
      %s79 = sphi 0, %s65
      %s83 = sphi 0, %s83
      %s85 = sphi 0, %s83
      %s86 = sphi 0, %s85
      %s100 = sphi 0, %s86
      %s104 = sphi 0, %s104
      %s106 = sphi 0, %s104
      %s107 = sphi 0, %s106
      %s121 = sphi 0, %s107
      %s125 = sphi 0, %s125
      %s127 = sphi 0, %s125
      %s128 = sphi 0, %s127
      %s142 = sphi 0, %s128
      %s150 = sphi 0, %s152
      %s153 = sphi 0, %s150
      %s154 = sphi 0, %s153
      %s170 = sphi 0, %s154
    $region4: #{tpu_custom_call.1} parent=1 // loop_header_branch
      %17 = sbr.rel (%p15) target = $region8
    $region5: #{tpu_custom_call.1} parent=1 // loop_body
      %s19 = ssub.s32 %s14, 1
      %s20 = ssub.s32 %s14, 2
      %s27 = sadd.s32 1, %s22
      %p28 = scmp.ge.s32.totalorder %s27, 1
      %s29 = scalar_select %p28, 0, %s27
      %s30 = sadd.s32 1, %s21
      %s31 = scalar_select %p28, %s30, %s21
      %p32 = scmp.ge.s32.totalorder %s31, 2
      %s33 = scalar_select %p32, 0, %s31
      %s34 = ssub.s32 %s21, %s33
      %s35 = ssub.s32 %s22, %s29
      %s36 = sor.u32 %s34, %s35
      %p37 = scmp.eq.s32.totalorder %s36, 0
      %s39 = sadd.s32 %s38, 1
      %s40 = scalar_select %p37, %s38, %s39
      %p43 = pneg %p37
      %p44 = scmp.eq.s32.totalorder %s14, 1
      %p45 = por %p43, %p44
      %p46 = scmp.ne.s32.totalorder %s38, %s41
      %p47 = scmp.eq.s32.totalorder %s14, 0
      %p48 = por %p46, %p47
      %p49 = scmp.ne.s32.totalorder %s38, %s41
      %p50 = scmp.eq.s32.totalorder %s19, 1
      %p51 = por %p49, %p50
      %p52 = scmp.ne.s32.totalorder %s41, %s42
      %p53 = scmp.eq.s32.totalorder %s19, 0
      %p54 = por %p52, %p53
      %p55 = scmp.ne.s32.totalorder %s41, %s42
      %p56 = scmp.eq.s32.totalorder %s20, 1
      %p57 = por %p55, %p56
      %p59 = scmp.ne.s32.totalorder %s42, %s58
      %p60 = scmp.eq.s32.totalorder %s20, 0
      %p61 = por %p59, %p60
      %s63 = sadd.s32 %s62, 1
      %p66 = scmp.eq.s32.totalorder %s14, 1
      %p67 = scmp.ne.s32.totalorder %s62, %s64
      %p68 = scmp.eq.s32.totalorder %s14, 0
      %p69 = por %p67, %p68
      %p70 = scmp.ne.s32.totalorder %s62, %s64
      %p71 = scmp.eq.s32.totalorder %s19, 1
      %p72 = por %p70, %p71
      %p73 = scmp.ne.s32.totalorder %s64, %s65
      %p74 = scmp.eq.s32.totalorder %s19, 0
      %p75 = por %p73, %p74
      %p76 = scmp.ne.s32.totalorder %s64, %s65
      %p77 = scmp.eq.s32.totalorder %s20, 1
      %p78 = por %p76, %p77
      %p80 = scmp.ne.s32.totalorder %s65, %s79
      %p81 = scmp.eq.s32.totalorder %s20, 0
      %p82 = por %p80, %p81
      %s84 = sadd.s32 %s83, 1
      %p87 = scmp.eq.s32.totalorder %s14, 1
      %p88 = scmp.ne.s32.totalorder %s83, %s85
      %p89 = scmp.eq.s32.totalorder %s14, 0
      %p90 = por %p88, %p89
      %p91 = scmp.ne.s32.totalorder %s83, %s85
      %p92 = scmp.eq.s32.totalorder %s19, 1
      %p93 = por %p91, %p92
      %p94 = scmp.ne.s32.totalorder %s85, %s86
      %p95 = scmp.eq.s32.totalorder %s19, 0
      %p96 = por %p94, %p95
      %p97 = scmp.ne.s32.totalorder %s85, %s86
      %p98 = scmp.eq.s32.totalorder %s20, 1
      %p99 = por %p97, %p98
      %p101 = scmp.ne.s32.totalorder %s86, %s100
      %p102 = scmp.eq.s32.totalorder %s20, 0
      %p103 = por %p101, %p102
      %s105 = sadd.s32 %s104, 1
      %p108 = scmp.eq.s32.totalorder %s14, 1
      %p109 = scmp.ne.s32.totalorder %s104, %s106
      %p110 = scmp.eq.s32.totalorder %s14, 0
      %p111 = por %p109, %p110
      %p112 = scmp.ne.s32.totalorder %s104, %s106
      %p113 = scmp.eq.s32.totalorder %s19, 1
      %p114 = por %p112, %p113
      %p115 = scmp.ne.s32.totalorder %s106, %s107
      %p116 = scmp.eq.s32.totalorder %s19, 0
      %p117 = por %p115, %p116
      %p118 = scmp.ne.s32.totalorder %s106, %s107
      %p119 = scmp.eq.s32.totalorder %s20, 1
      %p120 = por %p118, %p119
      %p122 = scmp.ne.s32.totalorder %s107, %s121
      %p123 = scmp.eq.s32.totalorder %s20, 0
      %p124 = por %p122, %p123
      %s126 = sadd.s32 %s125, 1
      %p129 = scmp.eq.s32.totalorder %s14, 1
      %p130 = scmp.ne.s32.totalorder %s125, %s127
      %p131 = scmp.eq.s32.totalorder %s14, 0
      %p132 = por %p130, %p131
      %p133 = scmp.ne.s32.totalorder %s125, %s127
      %p134 = scmp.eq.s32.totalorder %s19, 1
      %p135 = por %p133, %p134
      %p136 = scmp.ne.s32.totalorder %s127, %s128
      %p137 = scmp.eq.s32.totalorder %s19, 0
      %p138 = por %p136, %p137
      %p139 = scmp.ne.s32.totalorder %s127, %s128
      %p140 = scmp.eq.s32.totalorder %s20, 1
      %p141 = por %p139, %p140
      %p143 = scmp.ne.s32.totalorder %s128, %s142
      %p144 = scmp.eq.s32.totalorder %s20, 0
      %p145 = por %p143, %p144
      %s146 = ssub.s32 %s21, %s33
      %s147 = ssub.s32 %s22, %s29
      %s148 = sor.u32 %s146, %s147
      %p149 = scmp.eq.s32.totalorder %s148, 0
      %s151 = sadd.s32 %s150, 1
      %s152 = scalar_select %p149, %s150, %s151
      %p155 = pneg %p149
      %p156 = scmp.eq.s32.totalorder %s14, 1
      %p157 = por %p155, %p156
      %p158 = scmp.ne.s32.totalorder %s150, %s153
      %p159 = scmp.eq.s32.totalorder %s14, 0
      %p160 = por %p158, %p159
      %p161 = scmp.ne.s32.totalorder %s150, %s153
      %p162 = scmp.eq.s32.totalorder %s19, 1
      %p163 = por %p161, %p162
      %p164 = scmp.ne.s32.totalorder %s153, %s154
      %p165 = scmp.eq.s32.totalorder %s19, 0
      %p166 = por %p164, %p165
      %p167 = scmp.ne.s32.totalorder %s153, %s154
      %p168 = scmp.eq.s32.totalorder %s20, 1
      %p169 = por %p167, %p168
      %p171 = scmp.ne.s32.totalorder %s154, %s170
      %p172 = scmp.eq.s32.totalorder %s20, 0
      %p173 = por %p171, %p172
      %p174 = scmp.le.s32.totalorder 1, %s14
      %p175 = scmp.lt.s32.totalorder %s14, 3
      %p176 = pnand %p174, %p175
      %p177 = pneg %p176
      // Predicated region
      $region9: #{tpu_custom_call.1} parent=5 // pred_check
        _
      $region10: #{tpu_custom_call.1} parent=5 // pred_check_branch
        %179 = sbr.rel (%p176) target = $region12
      $region11: #{tpu_custom_call.1} parent=5 // pred_region
        %s180 = ssub.s32 %s14, 1
        // Predicated region
        $region13: #{tpu_custom_call.1} parent=11 // pred_check
          %p181 = pneg %p75
        $region14: #{tpu_custom_call.1} parent=11 // pred_check_branch
          %183 = sbr.rel (%p181) target = $region16
        $region15: #{tpu_custom_call.1} parent=11 // pred_region
          _
        $region16: #{tpu_custom_call.1} parent=11 // pred_fallthru
          _
        // Predicated region
        $region17: #{tpu_custom_call.1} parent=11 // pred_check
          %p184 = pneg %p96
        $region18: #{tpu_custom_call.1} parent=11 // pred_check_branch
          %186 = sbr.rel (%p184) target = $region20
        $region19: #{tpu_custom_call.1} parent=11 // pred_region
          _
        $region20: #{tpu_custom_call.1} parent=11 // pred_fallthru
          _
        // Predicated region
        $region21: #{tpu_custom_call.1} parent=11 // pred_check
          %p187 = pneg %p117
        $region22: #{tpu_custom_call.1} parent=11 // pred_check_branch
          %189 = sbr.rel (%p187) target = $region24
        $region23: #{tpu_custom_call.1} parent=11 // pred_region
          _
        $region24: #{tpu_custom_call.1} parent=11 // pred_fallthru
          _
        // Predicated region
        $region25: #{tpu_custom_call.1} parent=11 // pred_check
          %p190 = pneg %p138
        $region26: #{tpu_custom_call.1} parent=11 // pred_check_branch
          %192 = sbr.rel (%p190) target = $region28
        $region27: #{tpu_custom_call.1} parent=11 // pred_region
          _
        $region28: #{tpu_custom_call.1} parent=11 // pred_fallthru
          _
      $region12: #{tpu_custom_call.1} parent=5 // pred_fallthru
        _
      %p193 = scmp.lt.s32.totalorder %s14, 2
      // Predicated region
      $region29: #{tpu_custom_call.1} parent=5 // pred_check
        %p194 = pneg %p193
      $region30: #{tpu_custom_call.1} parent=5 // pred_check_branch
        %196 = sbr.rel (%p194) target = $region32
      $region31: #{tpu_custom_call.1} parent=5 // pred_region
        // Predicated region
        $region33: #{tpu_custom_call.1} parent=31 // pred_check
          %p197 = pneg %p48
        $region34: #{tpu_custom_call.1} parent=31 // pred_check_branch
          %199 = sbr.rel (%p197) target = $region36
        $region35: #{tpu_custom_call.1} parent=31 // pred_region
          %s200 = smul.u32 2, %s22
          %p201 = scmp.lt.s32.totalorder %s21, 1
          %s202 = scalar_select %p201, %s21, 1
          %p203 = scmp.lt.s32.totalorder %s200, 1
          %s204 = scalar_select %p203, %s200, 1
          %s205 = smul.addr %s202, 2
          %s206 = sadd.s32 %s204, %s205
          %s207 = smul.addr %s206, 4
          %s208 = scalar_lea.vmem %s0, %s207
          %s209 = smul.u32 2, %s22
        $region36: #{tpu_custom_call.1} parent=31 // pred_fallthru
          _
      $region32: #{tpu_custom_call.1} parent=5 // pred_fallthru
        _
      %p210 = scmp.le.s32.totalorder 1, %s14
      %p211 = scmp.lt.s32.totalorder %s14, 3
      %p212 = pnand %p210, %p211
      %p213 = pneg %p212
      // Predicated region
      $region37: #{tpu_custom_call.1} parent=5 // pred_check
        _
      $region38: #{tpu_custom_call.1} parent=5 // pred_check_branch
        %215 = sbr.rel (%p212) target = $region40
      $region39: #{tpu_custom_call.1} parent=5 // pred_region
        %s216 = ssub.s32 %s14, 1
        %s217 = smul.u32 2, %s24
        %p218 = scmp.lt.s32.totalorder %s23, 1
        %s219 = scalar_select %p218, %s23, 1
        %p220 = scmp.lt.s32.totalorder %s217, 1
        %s221 = scalar_select %p220, %s217, 1
        %s222 = smul.addr %s219, 2
        %s223 = sadd.s32 %s221, %s222
        %s224 = smul.addr %s223, 4
        %s225 = scalar_lea.vmem %s0, %s224
        %p226 = pneg %p54
        %p227 = pneg %p51
        %p228 = pneg %p75
        %p229 = pneg %p72
        %p230 = pneg %p96
        %p231 = pneg %p93
        %p232 = pneg %p117
        %p233 = pneg %p114
        %p234 = pneg %p138
        %p235 = pneg %p135
        %p236 = pneg %p166
        %p237 = pneg %p163
        %s238 = sand.u32 %s153, 1
        %s239 = scalar_lea.sflag [#allocation3], %s238
        %s240 = sand.u32 %s153, 1
        %s241 = smul.addr %s240, 4
        %s242 = scalar_lea.vmem [#allocation2], %s241
        %s243 = smul.u32 2, %s24
        %p244 = scmp.lt.s32.totalorder %s23, 1
        %s245 = scalar_select %p244, %s23, 1
        %p246 = scmp.lt.s32.totalorder %s243, 1
        %s247 = scalar_select %p246, %s243, 1
        %s248 = smul.addr %s245, 2
        %s249 = sadd.s32 %s247, %s248
        %s250 = smul.addr %s249, 4
        %s251 = scalar_lea.vmem %s0, %s250
        %s252 = smul.u32 2, %s24
        %s253 = smul.u32 2, %s24
        %v255 = vld [vmem:[%s251] sm:$0xff]
        %v257 = vcombine.high %v255, %v255
        %v259 = vpack.c.bf16 %v255, %v255
        %v260 = vpack.c.bf16 %v257, %v257
        %v261 = vld [vmem:[%s1] sm:$0xf]
        %v262 = vld [vmem:[%s1 + $0x4] sm:$0xf]
        %v263 = vld [vmem:[%s1 + $0x8] sm:$0xf]
        %v264 = vld [vmem:[%s1 + $0xc] sm:$0xf]
        %v265 = vld [vmem:[%s2] sm:$0xff]
        %v266 = vld [vmem:[%s2 + $0x8] sm:$0xff]
        %v267 = vld [vmem:[%s2 + $0x10] sm:$0xff]
        %v268 = vld [vmem:[%s2 + $0x18] sm:$0xff]
        %270 = vset.pattern.permute.xlu0 0
        %271 = vperm.xlu0 %270, %v265
        %v272 = vpop.permute.xlu0 %271
        %275 = vset.pattern.permute.xlu0 0
        %276 = vperm.xlu0 %275, %v266
        %v277 = vpop.permute.xlu0 %276
        %280 = vset.pattern.permute.xlu0 0
        %281 = vperm.xlu0 %280, %v267
        %v282 = vpop.permute.xlu0 %281
        %285 = vset.pattern.permute.xlu0 0
        %286 = vperm.xlu0 %285, %v268
        %v287 = vpop.permute.xlu0 %286
        %v293 = vunpack.c.l.b16 %v261
        %v294 = vunpack.c.l.b16 %v262
        %v295 = vunpack.c.l.b16 %v263
        %v296 = vunpack.c.l.b16 %v264
        %v297 = vpack.c.b16 %v294, %v293
        %v298 = vpack.c.b16 %v296, %v295
        %vm299 = vcmask 31744
        %v301 = vsel %vm299, %v297, 0
        %v304 = vsel %vm299, %v298, 0
        %vm306 = vcmask 1041408
        %v308 = vsel %vm306, %v259, 0
        %v311 = vsel %vm306, %v260, 0
        %313 = vmatprep.subr.bf16.mxu0 %v311
        %314 = vmatpush1.bf16.msra.mxu0 %v308
        %315 = vmatprep.subr.bf16.mxu0 0
        %316 = vmatpush1.bf16.msra.mxu0 0
        %317 = vmatprep.subr.bf16.mxu0 0
        %318 = vmatpush1.bf16.msra.mxu0 0
        %319 = vmatprep.subr.bf16.mxu0 0
        %320 = vmatpush1.bf16.msra.mxu0 0
        %321 = vmatprep.subr.bf16.mxu0 0
        %322 = vmatpush1.bf16.msra.mxu0 0
        %323 = vmatprep.subr.bf16.mxu0 0
        %324 = vmatpush1.bf16.msra.mxu0 0
        %325 = vmatprep.subr.bf16.mxu0 0
        %326 = vmatpush1.bf16.msra.mxu0 0
        %327 = vmatprep.subr.bf16.mxu0 0
        %328 = vmatpush1.bf16.msra.mxu0 0
        %329 = vmatprep.subr.bf16.mxu0 0
        %330 = vmatpush1.bf16.msra.mxu0 0
        %331 = vmatprep.subr.bf16.mxu0 0
        %332 = vmatpush1.bf16.msra.mxu0 0
        %333 = vmatprep.subr.bf16.mxu0 0
        %334 = vmatpush1.bf16.msra.mxu0 0
        %335 = vmatprep.subr.bf16.mxu0 0
        %336 = vmatpush1.bf16.msra.mxu0 0
        %337 = vmatprep.subr.bf16.mxu0 0
        %338 = vmatpush1.bf16.msra.mxu0 0
        %339 = vmatprep.subr.bf16.mxu0 0
        %340 = vmatpush1.bf16.msra.mxu0 0
        %341 = vmatprep.subr.bf16.mxu0 0
        %342 = vmatpush1.bf16.msra.mxu0 0
        %343 = vmatprep.subr.bf16.mxu0 0
        %344 = vmatpush1.bf16.msra.mxu0 0
        %345 = vmatprep.mubr.bf16.mxu0 0
        %346 = vmatmul.mubr.bf16.gmra.mrb[0].mxu0 %v301
        %v347 = vpop.f32.mrb[0].mxu0
        %v348 = vadd.f32 %v272, %v347
        %v349 = vpop.f32.mrb[0].mxu0
        %v350 = vadd.f32 %v272, %v349
        %v351 = vpop.f32.mrb[0].mxu0
        %v352 = vadd.f32 %v277, %v351
        %v353 = vpop.f32.mrb[0].mxu0
        %v354 = vadd.f32 %v277, %v353
        %355 = vmatprep.mubr.bf16.mxu0 0
        %356 = vmatmul.mubr.bf16.gmra.mrb[0].mxu0 %v304
        %v357 = vpop.f32.mrb[0].mxu0
        %v358 = vadd.f32 %v282, %v357
        %v359 = vpop.f32.mrb[0].mxu0
        %v360 = vadd.f32 %v282, %v359
        %v361 = vpop.f32.mrb[0].mxu0
        %v362 = vadd.f32 %v287, %v361
        %v363 = vpop.f32.mrb[0].mxu0
        %v364 = vadd.f32 %v287, %v363
        %365 = vdwg.mxu0
        %v366 = vmax.f32 %v348, 0.0
        %v367 = vmax.f32 %v350, 0.0
        %v368 = vmax.f32 %v352, 0.0
        %v369 = vmax.f32 %v354, 0.0
        %v370 = vmax.f32 %v358, 0.0
        %v371 = vmax.f32 %v360, 0.0
        %v372 = vmax.f32 %v362, 0.0
        %v373 = vmax.f32 %v364, 0.0
        %v374 = vld [vmem:[%s3] sm:$0x3]
        %v375 = vpack.c.bf16 %v368, %v366
        %v376 = vpack.c.bf16 %v369, %v367
        %v377 = vpack.c.bf16 %v372, %v370
        %v378 = vpack.c.bf16 %v373, %v371
        %v379 = vld [vmem:[%s4] sm:$0xf]
        %381 = vset.pattern.permute.xlu0 0
        %382 = vperm.xlu0 %381, %v379
        %v383 = vpop.permute.xlu0 %382
        %vm385 = vcmask 261120
        %v387 = vsel %vm385, %v374, 0
        %389 = vmatprep.subr.bf16.mxu0 %v376
        %390 = vmatpush1.bf16.msra.mxu0 %v375
        %391 = vmatprep.subr.bf16.mxu0 %v378
        %392 = vmatpush1.bf16.msra.mxu0 %v377
        %393 = vmatprep.subr.bf16.mxu0 0
        %394 = vmatpush1.bf16.msra.mxu0 0
        %395 = vmatprep.subr.bf16.mxu0 0
        %396 = vmatpush1.bf16.msra.mxu0 0
        %397 = vmatprep.subr.bf16.mxu0 0
        %398 = vmatpush1.bf16.msra.mxu0 0
        %399 = vmatprep.subr.bf16.mxu0 0
        %400 = vmatpush1.bf16.msra.mxu0 0
        %401 = vmatprep.subr.bf16.mxu0 0
        %402 = vmatpush1.bf16.msra.mxu0 0
        %403 = vmatprep.subr.bf16.mxu0 0
        %404 = vmatpush1.bf16.msra.mxu0 0
        %405 = vmatprep.subr.bf16.mxu0 0
        %406 = vmatpush1.bf16.msra.mxu0 0
        %407 = vmatprep.subr.bf16.mxu0 0
        %408 = vmatpush1.bf16.msra.mxu0 0
        %409 = vmatprep.subr.bf16.mxu0 0
        %410 = vmatpush1.bf16.msra.mxu0 0
        %411 = vmatprep.subr.bf16.mxu0 0
        %412 = vmatpush1.bf16.msra.mxu0 0
        %413 = vmatprep.subr.bf16.mxu0 0
        %414 = vmatpush1.bf16.msra.mxu0 0
        %415 = vmatprep.subr.bf16.mxu0 0
        %416 = vmatpush1.bf16.msra.mxu0 0
        %417 = vmatprep.subr.bf16.mxu0 0
        %418 = vmatpush1.bf16.msra.mxu0 0
        %419 = vmatprep.subr.bf16.mxu0 0
        %420 = vmatpush1.bf16.msra.mxu0 0
        %421 = vmatprep.mubr.bf16.mxu0 0
        %422 = vmatmul.mubr.bf16.gmra.mrb[0].mxu0 %v387
        %v423 = vpop.f32.mrb[0].mxu0
        %v424 = vadd.f32 %v383, %v423
        %v425 = vpop.f32.mrb[0].mxu0
        %v426 = vadd.f32 %v383, %v425
        %v427 = vpop.f32.mrb[0].mxu0
        %v428 = vpop.f32.mrb[0].mxu0
        %429 = vdwg.mxu0
        %v430 = vpack.c.bf16 %v424, %v424
        %v431 = vpack.c.bf16 %v426, %v426
        %v434 = vcombine.low %v430, %v431
        %v436 = vunpack.c.l.s4 1983009808
        %v437 = vunpack.c.0.s8 %v436
        %v438 = vlaneseq
        %v439 = vshrl.u32 %v438, 7
        %v440 = vsub.s32 %v437, %v439
        %v441 = vrot.slane %v434, %v440
        %443 = vst [vmem:[%s242] sm:$0xf] %v441
        %s444 = sand.u32 %s153, 1
        %s445 = scalar_lea.sflag [#allocation3], %s444
        %s446 = sand.u32 %s153, 1
        %s447 = smul.addr %s446, 4
        %s448 = scalar_lea.vmem [#allocation2], %s447
        // Predicated region
        $region41: #{tpu_custom_call.1} parent=39 // pred_check
          %p449 = pneg %p163
        $region42: #{tpu_custom_call.1} parent=39 // pred_check_branch
          %451 = sbr.rel (%p449) target = $region44
        $region43: #{tpu_custom_call.1} parent=39 // pred_region
          %s452 = smul.u32 2, %s24
          %s454 = ssub.s32 64, 64
          %455 = vsyncadd %s445, %s454
          %s456 = smul.addr %s23, 2
          %s457 = sadd.s32 %s452, %s456
          %s458 = smul.addr %s457, 32
          %s459 = scalar_lea.hbm %s5, %s458
          %s461 = sshll.u32 %s448, 4
          %s462 = int_to_ptr.vmem [resolvable:$true] %s461
          %464 = dma.vmem_to_hbm [thread:$0]  %s462, 64, %s459, %s445
        $region44: #{tpu_custom_call.1} parent=39 // pred_fallthru
          _
      $region40: #{tpu_custom_call.1} parent=5 // pred_fallthru
        _
      %p465 = scmp.le.s32.totalorder 2, %s14
      // Predicated region
      $region45: #{tpu_custom_call.1} parent=5 // pred_check
        %p466 = pneg %p465
      $region46: #{tpu_custom_call.1} parent=5 // pred_check_branch
        %468 = sbr.rel (%p466) target = $region48
      $region47: #{tpu_custom_call.1} parent=5 // pred_region
        %s469 = ssub.s32 %s14, 2
        // Predicated region
        $region49: #{tpu_custom_call.1} parent=47 // pred_check
          %p470 = pneg %p169
        $region50: #{tpu_custom_call.1} parent=47 // pred_check_branch
          %472 = sbr.rel (%p470) target = $region52
        $region51: #{tpu_custom_call.1} parent=47 // pred_region
          %s473 = sand.u32 %s154, 1
          %s474 = scalar_lea.sflag [#allocation3], %s473
          %s475 = sand.u32 %s154, 1
          %s476 = smul.addr %s475, 4
          %s477 = scalar_lea.vmem [#allocation2], %s476
          %478 = dma.done %s474, 64
        $region52: #{tpu_custom_call.1} parent=47 // pred_fallthru
          _
      $region48: #{tpu_custom_call.1} parent=5 // pred_fallthru
        _
    $region6: #{tpu_custom_call.1} parent=1 // loop_footer
      %s18 = sadd.s32 1, %s14
    $region7: #{tpu_custom_call.1} parent=1 // loop_footer_branch
      %13 = sbr.rel target = $region3
    $region8: #{tpu_custom_call.1} parent=1 // loop_exit
      _
    %479 = vsyncpa [#allocation3], 1
    %s480 = scalar_lea.sflag [#allocation3], 1
    %481 = vsyncpa %s480, 1

</llo_original>
